<compile_context>
chip_gen: v6e
topology: v6e:2x2x1
jax: 0.10.0
libtpu: 0.0.40
codegen_flags: <defaults>
</compile_context>

<pallas_src>
import math
from functools import partial

import jax
import jax.numpy as jnp
from jax.experimental import pallas as pl
from jax.experimental.pallas import tpu as pltpu


# ---------------------------------------------------------------------------
# Tiled linear kernels (x @ w_t [+ b]) with K-reduction accumulator
# ---------------------------------------------------------------------------
def _matmul_kernel(x_ref, w_ref, o_ref, acc_ref):
    @pl.when(pl.program_id(2) == 0)
    def _init():
        acc_ref[...] = jnp.zeros_like(acc_ref)

    acc_ref[...] += jnp.dot(x_ref[...], w_ref[...],
                            preferred_element_type=jnp.float32)

    @pl.when(pl.program_id(2) == pl.num_programs(2) - 1)
    def _done():
        o_ref[...] = acc_ref[...].astype(o_ref.dtype)


def _matmul_bias_kernel(x_ref, w_ref, b_ref, o_ref, acc_ref):
    @pl.when(pl.program_id(2) == 0)
    def _init():
        acc_ref[...] = jnp.zeros_like(acc_ref)

    acc_ref[...] += jnp.dot(x_ref[...], w_ref[...],
                            preferred_element_type=jnp.float32)

    @pl.when(pl.program_id(2) == pl.num_programs(2) - 1)
    def _done():
        o_ref[...] = (acc_ref[...] + b_ref[...].astype(jnp.float32)).astype(o_ref.dtype)


def _pick_tile(size, target):
    """Largest multiple-of-128 tile <= target that evenly divides `size` (else full size)."""
    if size <= target:
        return size
    for cand in range(target, 0, -128):
        if cand > 0 and size % cand == 0:
            return cand
    return size


def linear(x, w_t, b=None, *, tm=256, tn=512, tk=512):
    """y = x @ w_t (+ b). w_t is stored pre-transposed: (in_features, out_features)."""
    M, K = x.shape
    _, N = w_t.shape
    tm, tn, tk = _pick_tile(M, tm), _pick_tile(N, tn), _pick_tile(K, tk)
    grid = (M // tm, N // tn, K // tk)

    in_specs = [
        pl.BlockSpec((tm, tk), lambda i, j, k: (i, k)),
        pl.BlockSpec((tk, tn), lambda i, j, k: (k, j)),
    ]
    args = [x, w_t]
    if b is not None:
        in_specs.append(pl.BlockSpec((1, tn), lambda i, j, k: (0, j)))
        args.append(b.reshape(1, N))
        kernel = _matmul_bias_kernel
    else:
        kernel = _matmul_kernel

    return pl.pallas_call(
        kernel,
        grid_spec=pltpu.PrefetchScalarGridSpec(
            num_scalar_prefetch=0,
            grid=grid,
            in_specs=in_specs,
            out_specs=pl.BlockSpec((tm, tn), lambda i, j, k: (i, j)),
            scratch_shapes=[pltpu.VMEM((tm, tn), jnp.float32)],
        ),
        out_shape=jax.ShapeDtypeStruct((M, N), x.dtype),
        compiler_params=pltpu.CompilerParams(
            dimension_semantics=("parallel", "parallel", "arbitrary")),
    )(*args)


# ---------------------------------------------------------------------------
# Pass 1: global key stabilizer  max( (d^-.25 * k) @ P^T )  over all (b, h, n, m)
# ---------------------------------------------------------------------------
def _key_max_kernel(k_ref, p_ref, mx_ref, *, data_normalizer):
    kd = jnp.dot(k_ref[...].astype(jnp.float32) * data_normalizer, p_ref[...],
                 preferred_element_type=jnp.float32)
    mx_ref[...] = jnp.max(kd, keepdims=True).astype(mx_ref.dtype)


# ---------------------------------------------------------------------------
# Pass 2: fused FastAttention (softmax-kernel feature maps + linear attention)
# One batch element per program; all heads processed together.
# ---------------------------------------------------------------------------
def _performer_attention_kernel(q_ref, k_ref, v_ref, p_ref, kmax_ref, o_ref, *,
                                num_heads, data_normalizer, ratio, eps):
    # q/k/v_ref : (1, H*n, dh)   head-major rows
    # p_ref     : (dh, m)        pre-transposed projection matrix
    # kmax_ref  : (1, 1)         global max of projected keys (from pass 1)
    # o_ref     : (1, n, H*dh)   lane-dense output, heads merged on the lane axis
    q = q_ref[0].astype(jnp.float32) * data_normalizer     # (H*n, dh)
    k = k_ref[0].astype(jnp.float32) * data_normalizer
    v = v_ref[0].astype(jnp.float32)                        # (H*n, dh)
    pt = p_ref[...].astype(jnp.float32)                     # (dh, m)
    hn, dh = q.shape
    n = hn // num_heads
    kmax = kmax_ref[0, 0]

    # softmax-kernel feature maps: one fat (H*n, dh) @ (dh, m) MXU matmul for all heads.
    qd = jnp.dot(q, pt, preferred_element_type=jnp.float32)  # (H*n, m)
    kd = jnp.dot(k, pt, preferred_element_type=jnp.float32)  # (H*n, m)
    diag_q = 0.5 * jnp.sum(q * q, axis=-1, keepdims=True)    # == sum(q^2)/2 * dn^2
    diag_k = 0.5 * jnp.sum(k * k, axis=-1, keepdims=True)
    q_prime = ratio * (jnp.exp(qd - diag_q - jnp.max(qd, axis=-1, keepdims=True)) + eps)
    k_prime = ratio * (jnp.exp(kd - diag_k - kmax) + eps)

    # linear attention, per head (static unrolled loop; rows are sublane-aligned slices)
    outs = []
    for h in range(num_heads):
        rows = slice(h * n, (h + 1) * n)
        qh, kh, vh = q_prime[rows], k_prime[rows], v[rows]         # (n,m),(n,m),(n,dh)
        k_sum = jnp.sum(kh, axis=0, keepdims=True)                 # (1, m)
        denom = jnp.sum(qh * k_sum, axis=-1, keepdims=True)        # (n, 1)
        d_inv = pl.reciprocal(denom, approx=False)                 # exact; tiny tensor
        context = jax.lax.dot_general(                             # k'^T @ v : (m, dh)
            kh, vh, (((0,), (0,)), ((), ())),
            preferred_element_type=jnp.float32)
        outs.append(jnp.dot(qh, context,
                            preferred_element_type=jnp.float32) * d_inv)  # (n, dh)

    o_ref[0] = jnp.concatenate(outs, axis=-1).astype(o_ref.dtype)  # (n, H*dh), 'b n (h d)'


# ---------------------------------------------------------------------------
# Parameter init (weights stored pre-transposed; orthogonal random projection)
# ---------------------------------------------------------------------------
def _orthogonal_matrix_chunk(key, cols):
    unstructured = jax.random.normal(key, (cols, cols), jnp.float32)
    q, _ = jnp.linalg.qr(unstructured)
    return q.T


def gaussian_orthogonal_random_matrix(key, nb_rows, nb_cols, scaling=0):
    nb_full_blocks = nb_rows // nb_cols
    keys = jax.random.split(key, nb_full_blocks + 2)
    blocks = [_orthogonal_matrix_chunk(keys[i], nb_cols) for i in range(nb_full_blocks)]
    remaining = nb_rows - nb_full_blocks * nb_cols
    if remaining > 0:
        blocks.append(_orthogonal_matrix_chunk(keys[nb_full_blocks], nb_cols)[:remaining])
    final = jnp.concatenate(blocks, axis=0)
    if scaling == 0:
        multiplier = jnp.linalg.norm(
            jax.random.normal(keys[-1], (nb_rows, nb_cols), jnp.float32), axis=1)
    elif scaling == 1:
        multiplier = math.sqrt(float(nb_cols)) * jnp.ones((nb_rows,), jnp.float32)
    else:
        raise ValueError(f"Invalid scaling {scaling}")
    return final * multiplier[:, None]


def init_params(key, dim, heads, dim_head, nb_features):
    inner_dim = heads * dim_head
    kq, kk, kv, ko, kb, kp = jax.random.split(key, 6)

    def lin(k, fan_in, fan_out):
        bound = 1.0 / math.sqrt(fan_in)
        return jax.random.uniform(k, (fan_in, fan_out), jnp.float32, -bound, bound)

    # qkv_bias=False -> fused, bias-free QKV projection; weights pre-transposed (in, out).
    w_qkv_t = jnp.concatenate(
        [lin(kq, dim, inner_dim), lin(kk, dim, inner_dim), lin(kv, dim, inner_dim)], axis=1)
    w_out_t = lin(ko, inner_dim, dim)
    b_out = jax.random.uniform(kb, (dim,), jnp.float32,
                               -1.0 / math.sqrt(inner_dim), 1.0 / math.sqrt(inner_dim))
    proj = gaussian_orthogonal_random_matrix(kp, nb_features, dim_head)     # (m, dh)
    return dict(w_qkv_t=w_qkv_t, w_out_t=w_out_t, b_out=b_out,
                proj_t=jnp.asarray(proj.T, jnp.float32))                    # (dh, m)


# ---------------------------------------------------------------------------
# Forward pass (default path: self-attention, no mask, reverse=False, dropout=0)
# ---------------------------------------------------------------------------
def attention_forward(params, x, *, heads, dim_head, nb_features):
    b, n, dim = x.shape
    inner_dim = heads * dim_head
    data_normalizer = dim_head ** (-0.25)
    ratio = nb_features ** (-0.5)
    eps = 1e-4

    # --- to_q / to_k / to_v as one fused tiled matmul (no bias) -------------
    qkv = linear(x.reshape(b * n, dim), params["w_qkv_t"])          # (b*n, 3*inner)
    q2d, k2d, v2d = jnp.split(qkv, 3, axis=-1)

    # --- global key stabilizer (Pallas, single whole-array block) -----------
    k_flat = k2d.reshape(b * n * heads, dim_head)                   # per-head key vectors
    kmax = pl.pallas_call(
        partial(_key_max_kernel, data_normalizer=data_normalizer),
        out_shape=jax.ShapeDtypeStruct((1, 1), jnp.float32),
    )(k_flat, params["proj_t"])

    # --- heads layout (b, h*n, dh): wrapper-side layout plumbing only -------
    def to_heads(t2d):
        t = jnp.transpose(t2d.reshape(b, n, heads, dim_head), (0, 2, 1, 3))
        return t.reshape(b, heads * n, dim_head)

    qh, kh, vh = map(to_heads, (q2d, k2d, v2d))

    # --- fused FastAttention kernel, grid over batch, all heads per step ----
    out = pl.pallas_call(
        partial(_performer_attention_kernel, num_heads=heads,
                data_normalizer=data_normalizer, ratio=ratio, eps=eps),
        grid_spec=pltpu.PrefetchScalarGridSpec(
            num_scalar_prefetch=0,
            grid=(b,),
            in_specs=[
                pl.BlockSpec((1, heads * n, dim_head), lambda i: (i, 0, 0)),
                pl.BlockSpec((1, heads * n, dim_head), lambda i: (i, 0, 0)),
                pl.BlockSpec((1, heads * n, dim_head), lambda i: (i, 0, 0)),
                pl.BlockSpec((dim_head, nb_features), lambda i: (0, 0)),
                pl.BlockSpec((1, 1), lambda i: (0, 0)),
            ],
            out_specs=pl.BlockSpec((1, n, inner_dim), lambda i: (i, 0, 0)),
        ),
        out_shape=jax.ShapeDtypeStruct((b, n, inner_dim), x.dtype),
        compiler_params=pltpu.CompilerParams(dimension_semantics=("parallel",)),
    )(qh, kh, vh, params["proj_t"], kmax)

    # --- output projection (tiled matmul + bias) -----------------------------
    out2d = linear(out.reshape(b * n, inner_dim), params["w_out_t"], params["b_out"])
    # TODO(synk): dropout (p=0.0) is a no-op; mask / cross-attention / reverse /
    #             generalized ReLU-kernel branches are unused by the default config.
    return out2d.reshape(b, n, dim)


# ---------------------------------------------------------------------------
# Pure-JAX reference (for a lightweight sanity check of the kernel path)
# ---------------------------------------------------------------------------
def _reference_forward(params, x, *, heads, dim_head, nb_features):
    b, n, dim = x.shape
    dn = dim_head ** (-0.25)
    ratio = nb_features ** (-0.5)
    eps = 1e-4
    qkv = x.reshape(b * n, dim) @ params["w_qkv_t"]
    q2d, k2d, v2d = jnp.split(qkv, 3, axis=-1)
    heads_ = lambda t: jnp.transpose(t.reshape(b, n, heads, dim_head), (0, 2, 1, 3))
    q, k, v = map(heads_, (q2d, k2d, v2d))                           # (b, h, n, dh)
    proj = params["proj_t"].T                                        # (m, dh)
    qd = jnp.einsum("bhnd,md->bhnm", dn * q, proj)
    kd = jnp.einsum("bhnd,md->bhnm", dn * k, proj)
    diag_q = jnp.sum(q ** 2, -1, keepdims=True) * 0.5 * dn ** 2
    diag_k = jnp.sum(k ** 2, -1, keepdims=True) * 0.5 * dn ** 2
    q_p = ratio * (jnp.exp(qd - diag_q - jnp.max(qd, axis=-1, keepdims=True)) + eps)
    k_p = ratio * (jnp.exp(kd - diag_k - jnp.max(kd)) + eps)
    k_sum = k_p.sum(axis=-2)
    d_inv = 1.0 / jnp.einsum("bhnm,bhm->bhn", q_p, k_sum)
    context = jnp.einsum("bhnm,bhne->bhme", k_p, v)
    o = jnp.einsum("bhme,bhnm,bhn->bhne", context, q_p, d_inv)
    o = jnp.transpose(o, (0, 2, 1, 3)).reshape(b * n, heads * dim_head)
    return (o @ params["w_out_t"] + params["b_out"]).reshape(b, n, dim)


# ---------------------------------------------------------------------------
if __name__ == "__main__":
    dim, heads, dim_head, nb_features = 64, 8, 64, 128      # nb_features=128 -> lane-dense features
    b, n = 2, 16

    root = jax.random.PRNGKey(0)
    k_param, k_x = jax.random.split(root)
    params = init_params(k_param, dim, heads, dim_head, nb_features)
    x = jax.random.normal(k_x, (b, n, dim), jnp.float32)

    out = attention_forward(params, x, heads=heads, dim_head=dim_head, nb_features=nb_features)
    jax.block_until_ready(out)

    assert out.shape == (b, n, dim)
    assert bool(jnp.all(jnp.isfinite(out)))

    # structural correctness check (tolerant of MXU vs XLA matmul precision differences)
    ref = _reference_forward(params, x, heads=heads, dim_head=dim_head, nb_features=nb_features)
    rel_err = float(jnp.max(jnp.abs(out - ref)) / (jnp.max(jnp.abs(ref)) + 1e-6))
    assert rel_err < 5e-2, f"kernel/reference mismatch: rel_err={rel_err}"

    print("KERNEL_OK")
</pallas_src>

<mosaic_0001>
module attributes {stable_mosaic.version = 11 : i64} {
  func.func @_matmul_kernel(%arg0: i32, %arg1: i32, %arg2: i32, %arg3: memref<32x64xf32, #tpu.memory_space<vmem>>, %arg4: memref<64x512xf32, #tpu.memory_space<vmem>>, %arg5: memref<32x512xf32, #tpu.memory_space<vmem>>, %arg6: memref<32x512xf32, #tpu.memory_space<vmem>>) attributes {dimension_semantics = [#tpu.dimension_semantics<parallel>, #tpu.dimension_semantics<parallel>, #tpu.dimension_semantics<arbitrary>], iteration_bounds = array<i64: 1, 3, 1>, scalar_prefetch = 0 : i64, scratch_operands = 1 : i64, tpu.core_type = #tpu.core_type<tc>, window_params = [{transform_indices = @transform_0, window_bounds = array<i64: 32, 64>}, {transform_indices = @transform_1, window_bounds = array<i64: 64, 512>}, {transform_indices = @transform_2, window_bounds = array<i64: 32, 512>}]} {
    %c0_i32 = arith.constant 0 : i32
    %0 = arith.cmpi eq, %arg2, %c0_i32 : i32
    %1 = arith.extui %0 : i1 to i32
    %c0_i32_0 = arith.constant 0 : i32
    %2 = arith.cmpi ne, %1, %c0_i32_0 : i32
    scf.if %2 {
      %cst_10 = arith.constant 0.000000e+00 : f32
      %12 = vector.broadcast %cst_10 : f32 to vector<32x512xf32>
      %c0_11 = arith.constant 0 : index
      %c0_12 = arith.constant 0 : index
      %13 = vector.load %arg6[%c0_11, %c0_12] : memref<32x512xf32, #tpu.memory_space<vmem>>, vector<32x512xf32>
      tpu.vector_store %arg6[%c0_11, %c0_12], %12 {strides = array<i32>} : memref<32x512xf32, #tpu.memory_space<vmem>>, vector<32x512xf32>,
    } else {
    }
    %c0 = arith.constant 0 : index
    %c0_1 = arith.constant 0 : index
    %3 = vector.load %arg6[%c0, %c0_1] : memref<32x512xf32, #tpu.memory_space<vmem>>, vector<32x512xf32>
    %c0_2 = arith.constant 0 : index
    %c0_3 = arith.constant 0 : index
    %4 = vector.load %arg3[%c0_2, %c0_3] : memref<32x64xf32, #tpu.memory_space<vmem>>, vector<32x64xf32>
    %c0_4 = arith.constant 0 : index
    %c0_5 = arith.constant 0 : index
    %5 = vector.load %arg4[%c0_4, %c0_5] : memref<64x512xf32, #tpu.memory_space<vmem>>, vector<64x512xf32>
    %cst = arith.constant dense<0.000000e+00> : vector<32x512xf32>
    %6 = tpu.matmul %4, %5, %cst {dimension_numbers = #tpu.dot_dimension_numbers<[1], [0], [0], [1], [0, 0, 1, 1], [], []>} : vector<32x64xf32>, vector<64x512xf32>, vector<32x512xf32> -> vector<32x512xf32>
    %7 = arith.addf %3, %6 : vector<32x512xf32>
    %c0_6 = arith.constant 0 : index
    %c0_7 = arith.constant 0 : index
    %8 = vector.load %arg6[%c0_6, %c0_7] : memref<32x512xf32, #tpu.memory_space<vmem>>, vector<32x512xf32>
    tpu.vector_store %arg6[%c0_6, %c0_7], %7 {strides = array<i32>} : memref<32x512xf32, #tpu.memory_space<vmem>>, vector<32x512xf32>,
    %c0_i32_8 = arith.constant 0 : i32
    %9 = arith.cmpi eq, %arg2, %c0_i32_8 : i32
    %10 = arith.extui %9 : i1 to i32
    %c0_i32_9 = arith.constant 0 : i32
    %11 = arith.cmpi ne, %10, %c0_i32_9 : i32
    scf.if %11 {
      %c0_10 = arith.constant 0 : index
      %c0_11 = arith.constant 0 : index
      %12 = vector.load %arg6[%c0_10, %c0_11] : memref<32x512xf32, #tpu.memory_space<vmem>>, vector<32x512xf32>
      %c0_12 = arith.constant 0 : index
      %c0_13 = arith.constant 0 : index
      %13 = vector.load %arg5[%c0_12, %c0_13] : memref<32x512xf32, #tpu.memory_space<vmem>>, vector<32x512xf32>
      tpu.vector_store %arg5[%c0_12, %c0_13], %12 {strides = array<i32>} : memref<32x512xf32, #tpu.memory_space<vmem>>, vector<32x512xf32>,
    } else {
    }
    return
  }
  func.func @transform_0(%arg0: i32, %arg1: i32, %arg2: i32) -> (i32, i32) {
    %c0_i32 = arith.constant 0 : i32
    return %arg0, %arg2 : i32, i32
  }
  func.func @transform_1(%arg0: i32, %arg1: i32, %arg2: i32) -> (i32, i32) {
    %c0_i32 = arith.constant 0 : i32
    return %arg2, %arg1 : i32, i32
  }
  func.func @transform_2(%arg0: i32, %arg1: i32, %arg2: i32) -> (i32, i32) {
    %c0_i32 = arith.constant 0 : i32
    return %arg0, %arg1 : i32, i32
  }
}

</mosaic_0001>

<llo_original>
// kernel: tpu_custom_call.1
$region0: #{tpu_custom_call.1}
  #allocation0 [shape = 'u32[]', space=smem, size = 0x4, offset = 0x4, fixed_abs, tag = 'smem constant byte address 0x4 - core index']
  #allocation1 [shape = 'u32[144,128]{1,0:T(1,128)}', space=vmem, size = 0x12000, scoped, tag = 'internal scratch']
  #allocation2 [shape = 'f32[32,512]{1,0:T(8,128)}', space=vmem, size = 0x10000, scoped, tag = 'scratch operand']
  %s0 = inlined_call_operand.hbm [shape: f32[32,64], index: 0, kind: input, shape index: {}]
  %s1 = inlined_call_operand.hbm [shape: f32[64,1536], index: 1, kind: input, shape index: {}]
  %s2 = inlined_call_operand.hbm [shape: f32[32,1536], index: 2, kind: output, shape index: {}]
  %s3 = sld [smem:[#allocation0]]
  $region57: #{tpu_custom_call.1} parent=0
    _
  %s5 = ssub.s32 1, %s3
  %s6 = scalar_select 0, %s5, %s3
  $region1: #{tpu_custom_call.1} parent=0
    #allocation3 [shape = 'u8[16384]{0}', space=vmem, size = 0x4000, scoped, tag = 'input window, operand 0, single buffered']
    #allocation4 [shape = 's32[2]{0}', space=sflag, size = 0x8, scoped, tag = 'scoped memory for tpu_custom_call.1']
    #allocation5 [shape = 's32[2]{0}', space=sflag, size = 0x8, scoped, tag = 'scoped memory for tpu_custom_call.1']
    #allocation6 [shape = 'u8[262144]{0}', space=vmem, size = 0x40000, scoped, tag = 'input window, operand 1']
    #allocation7 [shape = 's32[2]{0}', space=sflag, size = 0x8, scoped, tag = 'scoped memory for tpu_custom_call.1']
    #allocation8 [shape = 'u8[131072]{0}', space=vmem, size = 0x20000, scoped, tag = 'output window, operand 0']
    %7 = vsyncpa [#allocation4], 0
    %8 = vsyncpa [#allocation7], 0
    %s9 = scalar_lea.sflag [#allocation7], 1
    %10 = vsyncpa %s9, 0
    %11 = vsyncpa [#allocation5], 0
    %s12 = scalar_lea.sflag [#allocation5], 1
    %13 = vsyncpa %s12, 0
    loop: start=0, step=1, limit=5
    $region2: #{tpu_custom_call.1} parent=1 // loop_pre_header
      _
    $region3: #{tpu_custom_call.1} parent=1 // loop_header
      %s15 = sphi 0, %s19
      %p16 = scmp.ge.s32.totalorder %s15, 5
      %s22 = sphi 0, %s41
      %s23 = sphi 0, %s37
      %s24 = sphi 0, %s33
      %s25 = sphi 0, %s22
      %s26 = sphi 0, %s23
      %s27 = sphi 0, %s24
      %s28 = sphi 0, %s25
      %s29 = sphi 0, %s26
      %s30 = sphi 0, %s27
      %s46 = sphi 0, %s48
      %s49 = sphi 0, %s46
      %s50 = sphi 0, %s49
      %s66 = sphi 0, %s50
      %s74 = sphi 0, %s76
      %s77 = sphi 0, %s74
      %s78 = sphi 0, %s77
      %s94 = sphi 0, %s78
      %s102 = sphi 0, %s104
      %s105 = sphi 0, %s102
      %s106 = sphi 0, %s105
      %s122 = sphi 0, %s106
    $region4: #{tpu_custom_call.1} parent=1 // loop_header_branch
      %18 = sbr.rel (%p16) target = $region8
    $region5: #{tpu_custom_call.1} parent=1 // loop_body
      %s20 = ssub.s32 %s15, 1
      %s21 = ssub.s32 %s15, 2
      %s31 = sadd.s32 1, %s24
      %p32 = scmp.ge.s32.totalorder %s31, 1
      %s33 = scalar_select %p32, 0, %s31
      %s34 = sadd.s32 1, %s23
      %s35 = scalar_select %p32, %s34, %s23
      %p36 = scmp.ge.s32.totalorder %s35, 3
      %s37 = scalar_select %p36, 0, %s35
      %s38 = sadd.s32 1, %s22
      %s39 = scalar_select %p36, %s38, %s22
      %p40 = scmp.ge.s32.totalorder %s39, 1
      %s41 = scalar_select %p40, 0, %s39
      %s42 = ssub.s32 %s22, %s41
      %s43 = ssub.s32 %s24, %s33
      %s44 = sor.u32 %s42, %s43
      %p45 = scmp.eq.s32.totalorder %s44, 0
      %s47 = sadd.s32 %s46, 1
      %s48 = scalar_select %p45, %s46, %s47
      %p51 = pneg %p45
      %p52 = scmp.eq.s32.totalorder %s15, 2
      %p53 = por %p51, %p52
      %p54 = scmp.ne.s32.totalorder %s46, %s49
      %p55 = scmp.eq.s32.totalorder %s15, 0
      %p56 = por %p54, %p55
      %p57 = scmp.ne.s32.totalorder %s46, %s49
      %p58 = scmp.eq.s32.totalorder %s20, 2
      %p59 = por %p57, %p58
      %p60 = scmp.ne.s32.totalorder %s49, %s50
      %p61 = scmp.eq.s32.totalorder %s20, 0
      %p62 = por %p60, %p61
      %p63 = scmp.ne.s32.totalorder %s49, %s50
      %p64 = scmp.eq.s32.totalorder %s21, 2
      %p65 = por %p63, %p64
      %p67 = scmp.ne.s32.totalorder %s50, %s66
      %p68 = scmp.eq.s32.totalorder %s21, 0
      %p69 = por %p67, %p68
      %s70 = ssub.s32 %s24, %s33
      %s71 = ssub.s32 %s23, %s37
      %s72 = sor.u32 %s70, %s71
      %p73 = scmp.eq.s32.totalorder %s72, 0
      %s75 = sadd.s32 %s74, 1
      %s76 = scalar_select %p73, %s74, %s75
      %p79 = pneg %p73
      %p80 = scmp.eq.s32.totalorder %s15, 2
      %p81 = por %p79, %p80
      %p82 = scmp.ne.s32.totalorder %s74, %s77
      %p83 = scmp.eq.s32.totalorder %s15, 0
      %p84 = por %p82, %p83
      %p85 = scmp.ne.s32.totalorder %s74, %s77
      %p86 = scmp.eq.s32.totalorder %s20, 2
      %p87 = por %p85, %p86
      %p88 = scmp.ne.s32.totalorder %s77, %s78
      %p89 = scmp.eq.s32.totalorder %s20, 0
      %p90 = por %p88, %p89
      %p91 = scmp.ne.s32.totalorder %s77, %s78
      %p92 = scmp.eq.s32.totalorder %s21, 2
      %p93 = por %p91, %p92
      %p95 = scmp.ne.s32.totalorder %s78, %s94
      %p96 = scmp.eq.s32.totalorder %s21, 0
      %p97 = por %p95, %p96
      %s98 = ssub.s32 %s22, %s41
      %s99 = ssub.s32 %s23, %s37
      %s100 = sor.u32 %s98, %s99
      %p101 = scmp.eq.s32.totalorder %s100, 0
      %s103 = sadd.s32 %s102, 1
      %s104 = scalar_select %p101, %s102, %s103
      %p107 = pneg %p101
      %p108 = scmp.eq.s32.totalorder %s15, 2
      %p109 = por %p107, %p108
      %p110 = scmp.ne.s32.totalorder %s102, %s105
      %p111 = scmp.eq.s32.totalorder %s15, 0
      %p112 = por %p110, %p111
      %p113 = scmp.ne.s32.totalorder %s102, %s105
      %p114 = scmp.eq.s32.totalorder %s20, 2
      %p115 = por %p113, %p114
      %p116 = scmp.ne.s32.totalorder %s105, %s106
      %p117 = scmp.eq.s32.totalorder %s20, 0
      %p118 = por %p116, %p117
      %p119 = scmp.ne.s32.totalorder %s105, %s106
      %p120 = scmp.eq.s32.totalorder %s21, 2
      %p121 = por %p119, %p120
      %p123 = scmp.ne.s32.totalorder %s106, %s122
      %p124 = scmp.eq.s32.totalorder %s21, 0
      %p125 = por %p123, %p124
      %p126 = scmp.le.s32.totalorder 1, %s15
      %p127 = scmp.lt.s32.totalorder %s15, 4
      %p128 = pnand %p126, %p127
      %p129 = pneg %p128
      // Predicated region
      $region9: #{tpu_custom_call.1} parent=5 // pred_check
        _
      $region10: #{tpu_custom_call.1} parent=5 // pred_check_branch
        %131 = sbr.rel (%p128) target = $region12
      $region11: #{tpu_custom_call.1} parent=5 // pred_region
        %s132 = ssub.s32 %s15, 1
        // Predicated region
        $region13: #{tpu_custom_call.1} parent=11 // pred_check
          %p133 = pneg %p62
        $region14: #{tpu_custom_call.1} parent=11 // pred_check_branch
          %135 = sbr.rel (%p133) target = $region16
        $region15: #{tpu_custom_call.1} parent=11 // pred_region
          %s136 = smul.u32 4, %s25
          %s138 = ssub.s32 512, 512
          %139 = vsyncadd [#allocation4], %s138
          %s140 = sadd.s32 %s27, %s136
          %s141 = smul.addr %s140, 128
          %s142 = scalar_lea.hbm %s0, %s141
          %s143 = sshll.u32 [#allocation3], 4
          %s144 = int_to_ptr.vmem [resolvable:$true] %s143
          %149 = dma.hbm_to_vmem [thread:$0]  %s142, 512, %s144, [#allocation4], 128, 128, 8
        $region16: #{tpu_custom_call.1} parent=11 // pred_fallthru
          _
      $region12: #{tpu_custom_call.1} parent=5 // pred_fallthru
        _
      %p150 = scmp.lt.s32.totalorder %s15, 3
      // Predicated region
      $region17: #{tpu_custom_call.1} parent=5 // pred_check
        %p151 = pneg %p150
      $region18: #{tpu_custom_call.1} parent=5 // pred_check_branch
        %153 = sbr.rel (%p151) target = $region20
      $region19: #{tpu_custom_call.1} parent=5 // pred_region
        // Predicated region
        $region21: #{tpu_custom_call.1} parent=19 // pred_check
          %p154 = pneg %p84
        $region22: #{tpu_custom_call.1} parent=19 // pred_check_branch
          %156 = sbr.rel (%p154) target = $region24
        $region23: #{tpu_custom_call.1} parent=19 // pred_region
          %s157 = sand.u32 %s74, 1
          %s158 = scalar_lea.sflag [#allocation7], %s157
          %s159 = sand.u32 %s74, 1
          %s160 = smul.addr %s159, 256
          %s161 = scalar_lea.vmem [#allocation6], %s160
          %s162 = smul.u32 8, %s24
          %s163 = smul.u32 4, %s23
          %s165 = ssub.s32 4096, 4096
          %166 = vsyncadd %s158, %s165
          %s167 = smul.addr %s162, 12
          %s168 = sadd.s32 %s163, %s167
          %s169 = smul.addr %s168, 128
          %s170 = scalar_lea.hbm %s1, %s169
          %s171 = sshll.u32 %s161, 4
          %s172 = int_to_ptr.vmem [resolvable:$true] %s171
          %177 = dma.hbm_to_vmem [thread:$0]  %s170, 4096, %s172, %s158, 1536, 512, 32
        $region24: #{tpu_custom_call.1} parent=19 // pred_fallthru
          _
      $region20: #{tpu_custom_call.1} parent=5 // pred_fallthru
        _
      %p178 = scmp.le.s32.totalorder 1, %s15
      %p179 = scmp.lt.s32.totalorder %s15, 4
      %p180 = pnand %p178, %p179
      %p181 = pneg %p180
      // Predicated region
      $region25: #{tpu_custom_call.1} parent=5 // pred_check
        _
      $region26: #{tpu_custom_call.1} parent=5 // pred_check_branch
        %183 = sbr.rel (%p180) target = $region28
      $region27: #{tpu_custom_call.1} parent=5 // pred_region
        %s184 = ssub.s32 %s15, 1
        // Predicated region
        $region29: #{tpu_custom_call.1} parent=27 // pred_check
          %p185 = pneg %p62
        $region30: #{tpu_custom_call.1} parent=27 // pred_check_branch
          %187 = sbr.rel (%p185) target = $region32
        $region31: #{tpu_custom_call.1} parent=27 // pred_region
          %188 = dma.done [#allocation4], 512
        $region32: #{tpu_custom_call.1} parent=27 // pred_fallthru
          _
        %s189 = sand.u32 %s77, 1
        %s190 = scalar_lea.sflag [#allocation7], %s189
        %s191 = sand.u32 %s77, 1
        %s192 = smul.addr %s191, 256
        %s193 = scalar_lea.vmem [#allocation6], %s192
        // Predicated region
        $region33: #{tpu_custom_call.1} parent=27 // pred_check
          %p194 = pneg %p90
        $region34: #{tpu_custom_call.1} parent=27 // pred_check_branch
          %196 = sbr.rel (%p194) target = $region36
        $region35: #{tpu_custom_call.1} parent=27 // pred_region
          %197 = dma.done %s190, 4096
        $region36: #{tpu_custom_call.1} parent=27 // pred_fallthru
          _
        %p198 = pneg %p62
        %p199 = pneg %p59
        %s200 = sand.u32 %s77, 1
        %s201 = scalar_lea.sflag [#allocation7], %s200
        %s202 = sand.u32 %s77, 1
        %s203 = smul.addr %s202, 256
        %s204 = scalar_lea.vmem [#allocation6], %s203
        %p205 = pneg %p90
        %p206 = pneg %p87
        %p207 = pneg %p118
        %p208 = pneg %p115
        %s209 = sand.u32 %s105, 1
        %s210 = scalar_lea.sflag [#allocation5], %s209
        %s211 = sand.u32 %s105, 1
        %s212 = smul.addr %s211, 128
        %s213 = scalar_lea.vmem [#allocation8], %s212
        %s214 = smul.u32 4, %s25
        %s215 = smul.u32 8, %s27
        %s216 = smul.u32 4, %s26
        %s217 = smul.u32 4, %s25
        %s218 = smul.u32 4, %s26
        %p219 = scmp.eq.s32.totalorder %s27, 0
        // Predicated region
        $region37: #{tpu_custom_call.1} parent=27 // pred_check
          %p220 = pneg %p219
        $region38: #{tpu_custom_call.1} parent=27 // pred_check_branch
          %222 = sbr.rel (%p220) target = $region40
        $region39: #{tpu_custom_call.1} parent=27 // pred_region
          %223 = vst [vmem:[#allocation2] sm:$0xff] 0.0
          %224 = vst [vmem:[#allocation2 + $0x8] sm:$0xff] 0.0
          %225 = vst [vmem:[#allocation2 + $0x10] sm:$0xff] 0.0
          %226 = vst [vmem:[#allocation2 + $0x18] sm:$0xff] 0.0
          %227 = vst [vmem:[#allocation2 + $0x20] sm:$0xff] 0.0
          %228 = vst [vmem:[#allocation2 + $0x28] sm:$0xff] 0.0
          %229 = vst [vmem:[#allocation2 + $0x30] sm:$0xff] 0.0
          %230 = vst [vmem:[#allocation2 + $0x38] sm:$0xff] 0.0
          %231 = vst [vmem:[#allocation2 + $0x40] sm:$0xff] 0.0
          %232 = vst [vmem:[#allocation2 + $0x48] sm:$0xff] 0.0
          %233 = vst [vmem:[#allocation2 + $0x50] sm:$0xff] 0.0
          %234 = vst [vmem:[#allocation2 + $0x58] sm:$0xff] 0.0
          %235 = vst [vmem:[#allocation2 + $0x60] sm:$0xff] 0.0
          %236 = vst [vmem:[#allocation2 + $0x68] sm:$0xff] 0.0
          %237 = vst [vmem:[#allocation2 + $0x70] sm:$0xff] 0.0
          %238 = vst [vmem:[#allocation2 + $0x78] sm:$0xff] 0.0
        $region40: #{tpu_custom_call.1} parent=27 // pred_fallthru
          _
        %v239 = vld [vmem:[#allocation2] sm:$0xff]
        %v240 = vld [vmem:[#allocation2 + $0x8] sm:$0xff]
        %v241 = vld [vmem:[#allocation2 + $0x10] sm:$0xff]
        %v242 = vld [vmem:[#allocation2 + $0x18] sm:$0xff]
        %v243 = vld [vmem:[#allocation2 + $0x20] sm:$0xff]
        %v244 = vld [vmem:[#allocation2 + $0x28] sm:$0xff]
        %v245 = vld [vmem:[#allocation2 + $0x30] sm:$0xff]
        %v246 = vld [vmem:[#allocation2 + $0x38] sm:$0xff]
        %v247 = vld [vmem:[#allocation2 + $0x40] sm:$0xff]
        %v248 = vld [vmem:[#allocation2 + $0x48] sm:$0xff]
        %v249 = vld [vmem:[#allocation2 + $0x50] sm:$0xff]
        %v250 = vld [vmem:[#allocation2 + $0x58] sm:$0xff]
        %v251 = vld [vmem:[#allocation2 + $0x60] sm:$0xff]
        %v252 = vld [vmem:[#allocation2 + $0x68] sm:$0xff]
        %v253 = vld [vmem:[#allocation2 + $0x70] sm:$0xff]
        %v254 = vld [vmem:[#allocation2 + $0x78] sm:$0xff]
        %v255 = vld [vmem:[#allocation3] sm:$0xff]
        %v256 = vld [vmem:[#allocation3 + $0x8] sm:$0xff]
        %v257 = vld [vmem:[#allocation3 + $0x10] sm:$0xff]
        %v258 = vld [vmem:[#allocation3 + $0x18] sm:$0xff]
        %v259 = vld [vmem:[%s193] sm:$0xff]
        %v260 = vld [vmem:[%s193 + $0x8] sm:$0xff]
        %v261 = vld [vmem:[%s193 + $0x10] sm:$0xff]
        %v262 = vld [vmem:[%s193 + $0x18] sm:$0xff]
        %v263 = vld [vmem:[%s193 + $0x20] sm:$0xff]
        %v264 = vld [vmem:[%s193 + $0x28] sm:$0xff]
        %v265 = vld [vmem:[%s193 + $0x30] sm:$0xff]
        %v266 = vld [vmem:[%s193 + $0x38] sm:$0xff]
        %v267 = vld [vmem:[%s193 + $0x40] sm:$0xff]
        %v268 = vld [vmem:[%s193 + $0x48] sm:$0xff]
        %v269 = vld [vmem:[%s193 + $0x50] sm:$0xff]
        %v270 = vld [vmem:[%s193 + $0x58] sm:$0xff]
        %v271 = vld [vmem:[%s193 + $0x60] sm:$0xff]
        %v272 = vld [vmem:[%s193 + $0x68] sm:$0xff]
        %v273 = vld [vmem:[%s193 + $0x70] sm:$0xff]
        %v274 = vld [vmem:[%s193 + $0x78] sm:$0xff]
        %v275 = vld [vmem:[%s193 + $0x80] sm:$0xff]
        %v276 = vld [vmem:[%s193 + $0x88] sm:$0xff]
        %v277 = vld [vmem:[%s193 + $0x90] sm:$0xff]
        %v278 = vld [vmem:[%s193 + $0x98] sm:$0xff]
        %v279 = vld [vmem:[%s193 + $0xa0] sm:$0xff]
        %v280 = vld [vmem:[%s193 + $0xa8] sm:$0xff]
        %v281 = vld [vmem:[%s193 + $0xb0] sm:$0xff]
        %v282 = vld [vmem:[%s193 + $0xb8] sm:$0xff]
        %v283 = vld [vmem:[%s193 + $0xc0] sm:$0xff]
        %v284 = vld [vmem:[%s193 + $0xc8] sm:$0xff]
        %v285 = vld [vmem:[%s193 + $0xd0] sm:$0xff]
        %v286 = vld [vmem:[%s193 + $0xd8] sm:$0xff]
        %v287 = vld [vmem:[%s193 + $0xe0] sm:$0xff]
        %v288 = vld [vmem:[%s193 + $0xe8] sm:$0xff]
        %v289 = vld [vmem:[%s193 + $0xf0] sm:$0xff]
        %v290 = vld [vmem:[%s193 + $0xf8] sm:$0xff]
        %vm291 = vcmask 523264
        %v293 = vsel %vm291, %v255, 0
        %v296 = vsel %vm291, %v256, 0
        %v299 = vsel %vm291, %v257, 0
        %v302 = vsel %vm291, %v258, 0
        %304 = vmatprep.subr.mxu0 0.0
        %305 = vmatpush1.msra.mxu0 0.0
        %306 = vmatprep.subr.mxu0 0.0
        %307 = vmatpush1.msra.mxu0 0.0
        %308 = vmatprep.subr.mxu0 0.0
        %309 = vmatpush1.msra.mxu0 0.0
        %310 = vmatprep.subr.mxu0 0.0
        %311 = vmatpush1.msra.mxu0 0.0
        %312 = vmatprep.subr.mxu0 0.0
        %313 = vmatpush1.msra.mxu0 0.0
        %314 = vmatprep.subr.mxu0 0.0
        %315 = vmatpush1.msra.mxu0 0.0
        %316 = vmatprep.subr.mxu0 0.0
        %317 = vmatpush1.msra.mxu0 0.0
        %318 = vmatprep.subr.mxu0 0.0
        %319 = vmatpush1.msra.mxu0 0.0
        %320 = vmatprep.subr.mxu0 %v288
        %321 = vmatpush1.msra.mxu0 %v287
        %322 = vmatprep.subr.mxu0 %v284
        %323 = vmatpush1.msra.mxu0 %v283
        %324 = vmatprep.subr.mxu0 %v280
        %325 = vmatpush1.msra.mxu0 %v279
        %326 = vmatprep.subr.mxu0 %v276
        %327 = vmatpush1.msra.mxu0 %v275
        %328 = vmatprep.subr.mxu0 %v272
        %329 = vmatpush1.msra.mxu0 %v271
        %330 = vmatprep.subr.mxu0 %v268
        %331 = vmatpush1.msra.mxu0 %v267
        %332 = vmatprep.subr.mxu0 %v264
        %333 = vmatpush1.msra.mxu0 %v263
        %334 = vmatprep.subr.mxu0 %v260
        %335 = vmatpush1.msra.mxu0 %v259
        %336 = vmatprep.subr.mxu0 0.0
        %337 = vmatpush2.msra.mxu0 0.0
        %338 = vmatprep.subr.mxu0 0.0
        %339 = vmatpush2.msra.mxu0 0.0
        %340 = vmatprep.subr.mxu0 0.0
        %341 = vmatpush2.msra.mxu0 0.0
        %342 = vmatprep.subr.mxu0 0.0
        %343 = vmatpush2.msra.mxu0 0.0
        %344 = vmatprep.subr.mxu0 0.0
        %345 = vmatpush2.msra.mxu0 0.0
        %346 = vmatprep.subr.mxu0 0.0
        %347 = vmatpush2.msra.mxu0 0.0
        %348 = vmatprep.subr.mxu0 0.0
        %349 = vmatpush2.msra.mxu0 0.0
        %350 = vmatprep.subr.mxu0 0.0
        %351 = vmatpush2.msra.mxu0 0.0
        %352 = vmatprep.subr.mxu0 0.0
        %353 = vmatpush2.msra.mxu0 0.0
        %354 = vmatprep.subr.mxu0 0.0
        %355 = vmatpush2.msra.mxu0 0.0
        %356 = vmatprep.subr.mxu0 0.0
        %357 = vmatpush2.msra.mxu0 0.0
        %358 = vmatprep.subr.mxu0 0.0
        %359 = vmatpush2.msra.mxu0 0.0
        %360 = vmatprep.subr.mxu0 0.0
        %361 = vmatpush2.msra.mxu0 0.0
        %362 = vmatprep.subr.mxu0 0.0
        %363 = vmatpush2.msra.mxu0 0.0
        %364 = vmatprep.subr.mxu0 0.0
        %365 = vmatpush2.msra.mxu0 0.0
        %366 = vmatprep.subr.mxu0 0.0
        %367 = vmatpush2.msra.mxu0 0.0
        %368 = vmatprep.mubr.f32.mxu0 0.0
        %369 = vmatmul.mubr.f32.gmra.mxu0 %v293
        %v370 = vpop.f32.mrf.mxu0
        %v371 = vadd.f32 0.0, %v370
        %v372 = vpop.f32.mrf.mxu0
        %v373 = vadd.f32 0.0, %v372
        %374 = vmatprep.mubr.f32.mxu0 0.0
        %375 = vmatmul.mubr.f32.gmra.mxu0 %v296
        %v376 = vpop.f32.mrf.mxu0
        %v377 = vadd.f32 0.0, %v376
        %v378 = vpop.f32.mrf.mxu0
        %v379 = vadd.f32 0.0, %v378
        %380 = vmatprep.mubr.f32.mxu0 0.0
        %381 = vmatmul.mubr.f32.gmra.mxu0 %v299
        %v382 = vpop.f32.mrf.mxu0
        %v383 = vadd.f32 0.0, %v382
        %v384 = vpop.f32.mrf.mxu0
        %v385 = vadd.f32 0.0, %v384
        %386 = vmatprep.mubr.f32.mxu0 0.0
        %387 = vmatmul.mubr.f32.gmra.mxu0 %v302
        %v388 = vpop.f32.mrf.mxu0
        %v389 = vadd.f32 0.0, %v388
        %v390 = vpop.f32.mrf.mxu0
        %v391 = vadd.f32 0.0, %v390
        %392 = vdwg.mxu0
        %393 = vmatprep.subr.mxu0 0.0
        %394 = vmatpush1.msra.mxu0 0.0
        %395 = vmatprep.subr.mxu0 0.0
        %396 = vmatpush1.msra.mxu0 0.0
        %397 = vmatprep.subr.mxu0 0.0
        %398 = vmatpush1.msra.mxu0 0.0
        %399 = vmatprep.subr.mxu0 0.0
        %400 = vmatpush1.msra.mxu0 0.0
        %401 = vmatprep.subr.mxu0 0.0
        %402 = vmatpush1.msra.mxu0 0.0
        %403 = vmatprep.subr.mxu0 0.0
        %404 = vmatpush1.msra.mxu0 0.0
        %405 = vmatprep.subr.mxu0 0.0
        %406 = vmatpush1.msra.mxu0 0.0
        %407 = vmatprep.subr.mxu0 0.0
        %408 = vmatpush1.msra.mxu0 0.0
        %409 = vmatprep.subr.mxu0 %v290
        %410 = vmatpush1.msra.mxu0 %v289
        %411 = vmatprep.subr.mxu0 %v286
        %412 = vmatpush1.msra.mxu0 %v285
        %413 = vmatprep.subr.mxu0 %v282
        %414 = vmatpush1.msra.mxu0 %v281
        %415 = vmatprep.subr.mxu0 %v278
        %416 = vmatpush1.msra.mxu0 %v277
        %417 = vmatprep.subr.mxu0 %v274
        %418 = vmatpush1.msra.mxu0 %v273
        %419 = vmatprep.subr.mxu0 %v270
        %420 = vmatpush1.msra.mxu0 %v269
        %421 = vmatprep.subr.mxu0 %v266
        %422 = vmatpush1.msra.mxu0 %v265
        %423 = vmatprep.subr.mxu0 %v262
        %424 = vmatpush1.msra.mxu0 %v261
        %425 = vmatprep.subr.mxu0 0.0
        %426 = vmatpush2.msra.mxu0 0.0
        %427 = vmatprep.subr.mxu0 0.0
        %428 = vmatpush2.msra.mxu0 0.0
        %429 = vmatprep.subr.mxu0 0.0
        %430 = vmatpush2.msra.mxu0 0.0
        %431 = vmatprep.subr.mxu0 0.0
        %432 = vmatpush2.msra.mxu0 0.0
        %433 = vmatprep.subr.mxu0 0.0
        %434 = vmatpush2.msra.mxu0 0.0
        %435 = vmatprep.subr.mxu0 0.0
        %436 = vmatpush2.msra.mxu0 0.0
        %437 = vmatprep.subr.mxu0 0.0
        %438 = vmatpush2.msra.mxu0 0.0
        %439 = vmatprep.subr.mxu0 0.0
        %440 = vmatpush2.msra.mxu0 0.0
        %441 = vmatprep.subr.mxu0 0.0
        %442 = vmatpush2.msra.mxu0 0.0
        %443 = vmatprep.subr.mxu0 0.0
        %444 = vmatpush2.msra.mxu0 0.0
        %445 = vmatprep.subr.mxu0 0.0
        %446 = vmatpush2.msra.mxu0 0.0
        %447 = vmatprep.subr.mxu0 0.0
        %448 = vmatpush2.msra.mxu0 0.0
        %449 = vmatprep.subr.mxu0 0.0
        %450 = vmatpush2.msra.mxu0 0.0
        %451 = vmatprep.subr.mxu0 0.0
        %452 = vmatpush2.msra.mxu0 0.0
        %453 = vmatprep.subr.mxu0 0.0
        %454 = vmatpush2.msra.mxu0 0.0
        %455 = vmatprep.subr.mxu0 0.0
        %456 = vmatpush2.msra.mxu0 0.0
        %457 = vmatprep.mubr.f32.mxu0 0.0
        %458 = vmatmul.mubr.f32.gmra.mxu0 %v293
        %v459 = vpop.f32.mrf.mxu0
        %v460 = vadd.f32 0.0, %v459
        %v461 = vpop.f32.mrf.mxu0
        %v462 = vadd.f32 0.0, %v461
        %463 = vmatprep.mubr.f32.mxu0 0.0
        %464 = vmatmul.mubr.f32.gmra.mxu0 %v296
        %v465 = vpop.f32.mrf.mxu0
        %v466 = vadd.f32 0.0, %v465
        %v467 = vpop.f32.mrf.mxu0
        %v468 = vadd.f32 0.0, %v467
        %469 = vmatprep.mubr.f32.mxu0 0.0
        %470 = vmatmul.mubr.f32.gmra.mxu0 %v299
        %v471 = vpop.f32.mrf.mxu0
        %v472 = vadd.f32 0.0, %v471
        %v473 = vpop.f32.mrf.mxu0
        %v474 = vadd.f32 0.0, %v473
        %475 = vmatprep.mubr.f32.mxu0 0.0
        %476 = vmatmul.mubr.f32.gmra.mxu0 %v302
        %v477 = vpop.f32.mrf.mxu0
        %v478 = vadd.f32 0.0, %v477
        %v479 = vpop.f32.mrf.mxu0
        %v480 = vadd.f32 0.0, %v479
        %481 = vdwg.mxu0
        %v482 = vadd.f32 %v239, %v371
        %v483 = vadd.f32 %v240, %v373
        %v484 = vadd.f32 %v241, %v460
        %v485 = vadd.f32 %v242, %v462
        %v486 = vadd.f32 %v243, %v377
        %v487 = vadd.f32 %v244, %v379
        %v488 = vadd.f32 %v245, %v466
        %v489 = vadd.f32 %v246, %v468
        %v490 = vadd.f32 %v247, %v383
        %v491 = vadd.f32 %v248, %v385
        %v492 = vadd.f32 %v249, %v472
        %v493 = vadd.f32 %v250, %v474
        %v494 = vadd.f32 %v251, %v389
        %v495 = vadd.f32 %v252, %v391
        %v496 = vadd.f32 %v253, %v478
        %v497 = vadd.f32 %v254, %v480
        %498 = vst [vmem:[#allocation2] sm:$0xff] %v482
        %499 = vst [vmem:[#allocation2 + $0x8] sm:$0xff] %v483
        %500 = vst [vmem:[#allocation2 + $0x10] sm:$0xff] %v484
        %501 = vst [vmem:[#allocation2 + $0x18] sm:$0xff] %v485
        %502 = vst [vmem:[#allocation2 + $0x20] sm:$0xff] %v486
        %503 = vst [vmem:[#allocation2 + $0x28] sm:$0xff] %v487
        %504 = vst [vmem:[#allocation2 + $0x30] sm:$0xff] %v488
        %505 = vst [vmem:[#allocation2 + $0x38] sm:$0xff] %v489
        %506 = vst [vmem:[#allocation2 + $0x40] sm:$0xff] %v490
        %507 = vst [vmem:[#allocation2 + $0x48] sm:$0xff] %v491
        %508 = vst [vmem:[#allocation2 + $0x50] sm:$0xff] %v492
        %509 = vst [vmem:[#allocation2 + $0x58] sm:$0xff] %v493
        %510 = vst [vmem:[#allocation2 + $0x60] sm:$0xff] %v494
        %511 = vst [vmem:[#allocation2 + $0x68] sm:$0xff] %v495
        %512 = vst [vmem:[#allocation2 + $0x70] sm:$0xff] %v496
        %513 = vst [vmem:[#allocation2 + $0x78] sm:$0xff] %v497
        // Predicated region
        $region41: #{tpu_custom_call.1} parent=27 // pred_check
          %p514 = pneg %p219
        $region42: #{tpu_custom_call.1} parent=27 // pred_check_branch
          %516 = sbr.rel (%p514) target = $region44
        $region43: #{tpu_custom_call.1} parent=27 // pred_region
          %v517 = vld [vmem:[#allocation2] sm:$0xff]
          %v518 = vld [vmem:[#allocation2 + $0x8] sm:$0xff]
          %v519 = vld [vmem:[#allocation2 + $0x10] sm:$0xff]
          %v520 = vld [vmem:[#allocation2 + $0x18] sm:$0xff]
          %v521 = vld [vmem:[#allocation2 + $0x20] sm:$0xff]
          %v522 = vld [vmem:[#allocation2 + $0x28] sm:$0xff]
          %v523 = vld [vmem:[#allocation2 + $0x30] sm:$0xff]
          %v524 = vld [vmem:[#allocation2 + $0x38] sm:$0xff]
          %v525 = vld [vmem:[#allocation2 + $0x40] sm:$0xff]
          %v526 = vld [vmem:[#allocation2 + $0x48] sm:$0xff]
          %v527 = vld [vmem:[#allocation2 + $0x50] sm:$0xff]
          %v528 = vld [vmem:[#allocation2 + $0x58] sm:$0xff]
          %v529 = vld [vmem:[#allocation2 + $0x60] sm:$0xff]
          %v530 = vld [vmem:[#allocation2 + $0x68] sm:$0xff]
          %v531 = vld [vmem:[#allocation2 + $0x70] sm:$0xff]
          %v532 = vld [vmem:[#allocation2 + $0x78] sm:$0xff]
          %533 = vst [vmem:[%s213] sm:$0xff] %v517
          %534 = vst [vmem:[%s213 + $0x8] sm:$0xff] %v518
          %535 = vst [vmem:[%s213 + $0x10] sm:$0xff] %v519
          %536 = vst [vmem:[%s213 + $0x18] sm:$0xff] %v520
          %537 = vst [vmem:[%s213 + $0x20] sm:$0xff] %v521
          %538 = vst [vmem:[%s213 + $0x28] sm:$0xff] %v522
          %539 = vst [vmem:[%s213 + $0x30] sm:$0xff] %v523
          %540 = vst [vmem:[%s213 + $0x38] sm:$0xff] %v524
          %541 = vst [vmem:[%s213 + $0x40] sm:$0xff] %v525
          %542 = vst [vmem:[%s213 + $0x48] sm:$0xff] %v526
          %543 = vst [vmem:[%s213 + $0x50] sm:$0xff] %v527
          %544 = vst [vmem:[%s213 + $0x58] sm:$0xff] %v528
          %545 = vst [vmem:[%s213 + $0x60] sm:$0xff] %v529
          %546 = vst [vmem:[%s213 + $0x68] sm:$0xff] %v530
          %547 = vst [vmem:[%s213 + $0x70] sm:$0xff] %v531
          %548 = vst [vmem:[%s213 + $0x78] sm:$0xff] %v532
        $region44: #{tpu_custom_call.1} parent=27 // pred_fallthru
          _
        %s549 = sand.u32 %s105, 1
        %s550 = scalar_lea.sflag [#allocation5], %s549
        %s551 = sand.u32 %s105, 1
        %s552 = smul.addr %s551, 128
        %s553 = scalar_lea.vmem [#allocation8], %s552
        // Predicated region
        $region45: #{tpu_custom_call.1} parent=27 // pred_check
          %p554 = pneg %p115
        $region46: #{tpu_custom_call.1} parent=27 // pred_check_branch
          %556 = sbr.rel (%p554) target = $region48
        $region47: #{tpu_custom_call.1} parent=27 // pred_region
          %s557 = smul.u32 4, %s25
          %s558 = smul.u32 4, %s26
          %s560 = ssub.s32 2048, 2048
          %561 = vsyncadd %s550, %s560
          %s562 = smul.addr %s557, 12
          %s563 = sadd.s32 %s558, %s562
          %s564 = smul.addr %s563, 128
          %s565 = scalar_lea.hbm %s2, %s564
          %s566 = sshll.u32 %s553, 4
          %s567 = int_to_ptr.vmem [resolvable:$true] %s566
          %572 = dma.vmem_to_hbm [thread:$0]  %s567, 2048, %s565, %s550, 512, 1536, 32
        $region48: #{tpu_custom_call.1} parent=27 // pred_fallthru
          _
      $region28: #{tpu_custom_call.1} parent=5 // pred_fallthru
        _
      %p573 = scmp.le.s32.totalorder 2, %s15
      // Predicated region
      $region49: #{tpu_custom_call.1} parent=5 // pred_check
        %p574 = pneg %p573
      $region50: #{tpu_custom_call.1} parent=5 // pred_check_branch
        %576 = sbr.rel (%p574) target = $region52
      $region51: #{tpu_custom_call.1} parent=5 // pred_region
        %s577 = ssub.s32 %s15, 2
        // Predicated region
        $region53: #{tpu_custom_call.1} parent=51 // pred_check
          %p578 = pneg %p121
        $region54: #{tpu_custom_call.1} parent=51 // pred_check_branch
          %580 = sbr.rel (%p578) target = $region56
        $region55: #{tpu_custom_call.1} parent=51 // pred_region
          %s581 = sand.u32 %s106, 1
          %s582 = scalar_lea.sflag [#allocation5], %s581
          %s583 = sand.u32 %s106, 1
          %s584 = smul.addr %s583, 128
          %s585 = scalar_lea.vmem [#allocation8], %s584
          %586 = dma.done %s582, 2048
        $region56: #{tpu_custom_call.1} parent=51 // pred_fallthru
          _
      $region52: #{tpu_custom_call.1} parent=5 // pred_fallthru
        _
    $region6: #{tpu_custom_call.1} parent=1 // loop_footer
      %s19 = sadd.s32 1, %s15
    $region7: #{tpu_custom_call.1} parent=1 // loop_footer_branch
      %14 = sbr.rel target = $region3
    $region8: #{tpu_custom_call.1} parent=1 // loop_exit
      _
    %587 = vsyncpa [#allocation4], 1
    %s588 = scalar_lea.sflag [#allocation4], 1
    %589 = vsyncpa %s588, 1
    %590 = vsyncpa [#allocation7], 1
    %s591 = scalar_lea.sflag [#allocation7], 1
    %592 = vsyncpa %s591, 1
    %593 = vsyncpa [#allocation5], 1
    %s594 = scalar_lea.sflag [#allocation5], 1
    %595 = vsyncpa %s594, 1

</llo_original>
